<compile_context>
chip_gen: v6e
topology: v6e:2x2x1
jax: 0.10.0
libtpu: 0.0.40
codegen_flags: <defaults>
</compile_context>

<pallas_src>
import jax
import jax.numpy as jnp
from jax.experimental import pallas as pl
from jax.experimental.pallas import tpu as pltpu

LN_EPS = 1e-5  # te.LayerNorm default eps


def _round_up(n, m):
    return (n + m - 1) // m * m


def _vmem_capacity_bytes():
    """Physical VMEM per TensorCore; conservative fallback if query fails."""
    try:
        info = pltpu.get_tpu_info()
        cap = getattr(info, "vmem_capacity_bytes", None)
        if cap:
            return int(cap)
    except Exception:
        pass
    return 64 << 20  # v7x-sized fallback (smallest of the listed parts)


def _vmem_limit(footprint_bytes, vmem_cap):
    """Scoped-VMEM limit: 2x headroom over estimated footprint, <= 90% physical."""
    limit = max(32 << 20, int(footprint_bytes) * 2)
    return int(min(limit, int(0.9 * vmem_cap)))


# ---------------------------------------------------------------------------
# Kernel bodies
# ---------------------------------------------------------------------------

def ffn_kernel_resident(x_ref, gamma_ref, beta_ref, w1_ref, b1_ref, w2_ref,
                        b2_ref, o_ref):
    """Grid = (token_tiles,). Full W1/W2 resident in VMEM (constant index_map)."""
    # LayerNorm in f32.
    x = x_ref[...].astype(jnp.float32)
    mean = jnp.mean(x, axis=-1, keepdims=True)
    centered = x - mean
    var = jnp.mean(centered * centered, axis=-1, keepdims=True)
    xn = centered * jax.lax.rsqrt(var + LN_EPS)
    xn = xn * gamma_ref[...].astype(jnp.float32) + beta_ref[...].astype(jnp.float32)
    xn = xn.astype(w1_ref.dtype)                         # back to MXU dtype

    # Linear1 + SiLU (f32 accumulation / activation).
    h = jnp.dot(xn, w1_ref[...], preferred_element_type=jnp.float32)
    h = h + b1_ref[...].astype(jnp.float32)
    h = h * jax.nn.sigmoid(h)                            # SiLU on EUP (f32)

    # Linear2 + bias.
    out = jnp.dot(h.astype(w2_ref.dtype), w2_ref[...],
                  preferred_element_type=jnp.float32)
    out = out + b2_ref[...].astype(jnp.float32)
    o_ref[...] = out.astype(o_ref.dtype)


def ffn_kernel_streamed(x_ref, gamma_ref, beta_ref, w1_ref, b1_ref, w2_ref,
                        b2_ref, o_ref, xn_ref, acc_ref):
    """Grid = (token_tiles [parallel], F_chunks [arbitrary])."""
    j = pl.program_id(1)

    # Once per token tile: LayerNorm, cache normalized x in VMEM.
    @pl.when(j == 0)
    def _ln():
        x = x_ref[...].astype(jnp.float32)
        mean = jnp.mean(x, axis=-1, keepdims=True)
        centered = x - mean
        var = jnp.mean(centered * centered, axis=-1, keepdims=True)
        xn = centered * jax.lax.rsqrt(var + LN_EPS)
        xn = xn * gamma_ref[...].astype(jnp.float32) + beta_ref[...].astype(jnp.float32)
        xn_ref[...] = xn.astype(xn_ref.dtype)

    # Per F-chunk: Linear1 slice + SiLU, then partial Linear2.
    h = jnp.dot(xn_ref[...], w1_ref[...], preferred_element_type=jnp.float32)
    h = h + b1_ref[...].astype(jnp.float32)
    h = h * jax.nn.sigmoid(h)
    partial = jnp.dot(h.astype(w2_ref.dtype), w2_ref[...],
                      preferred_element_type=jnp.float32)

    # First chunk stores, later chunks accumulate (saves a zero-fill + load).
    @pl.when(j == 0)
    def _store():
        acc_ref[...] = partial

    @pl.when(j != 0)
    def _accum():
        acc_ref[...] += partial

    # Last chunk: add bias, cast, write out.
    @pl.when(j == pl.num_programs(1) - 1)
    def _finalize():
        o_ref[...] = (acc_ref[...] + b2_ref[...].astype(jnp.float32)).astype(o_ref.dtype)


# ---------------------------------------------------------------------------
# Wrapper
# ---------------------------------------------------------------------------

def te_optimal_net_forward(x, gamma, beta, w1, b1, w2, b2):
    """x: (B, S, H). Weights stored as (in, out) == PyTorch weight.T."""
    B, S, H = x.shape
    F = w1.shape[1]
    assert w1.shape == (H, F) and w2.shape == (F, H)
    assert b1.shape == (F,) and b2.shape == (H,)

    T = B * S
    x2d = x.reshape(T, H)

    vmem_cap = _vmem_capacity_bytes()
    big_vmem = vmem_cap >= (100 << 20)      # 128 MiB parts (v5e/v6e) vs 64 MiB (v7x)

    act_bytes = jnp.dtype(x.dtype).itemsize
    w_itemsize = jnp.dtype(w1.dtype).itemsize
    weight_bytes = (w1.size + w2.size) * w_itemsize \
        + (b1.size + b2.size + gamma.size + beta.size) * 4

    # Resident path if a (conservatively double-buffered) copy of all weights
    # fits well inside the scoped-VMEM budget.
    resident = 2 * weight_bytes <= min(16 << 20, vmem_cap // 4)

    # Token tile: clamp to the real token count (bf16 sublane pack = 16 rows).
    tm_default = 256 if resident else (768 if big_vmem else 256)
    tm = max(16, min(tm_default, _round_up(T, 16)))
    Tp = _round_up(T, tm)
    if Tp != T:
        # Zero rows pass cleanly through LN (xn = beta) and are sliced off.
        x2d = jnp.pad(x2d, ((0, Tp - T), (0, 0)))
    num_token_tiles = Tp // tm

    # 2-D (lane-major) views of the small params.
    gamma2 = gamma.reshape(1, H)
    beta2 = beta.reshape(1, H)
    b1_2 = b1.reshape(1, F)
    b2_2 = b2.reshape(1, H)

    if resident:
        footprint = (4 * tm * H * act_bytes     # x + out, double-buffered
                     + 2 * weight_bytes         # resident weights (conservative 2x)
                     + tm * F * 4               # h intermediate (f32)
                     + tm * H * 4)              # LN temporaries
        cost = pl.CostEstimate(
            flops=4 * Tp * H * F,
            transcendentals=Tp * F,
            bytes_accessed=int(2 * Tp * H * act_bytes + weight_bytes),
        )
        out2d = pl.pallas_call(
            ffn_kernel_resident,
            out_shape=jax.ShapeDtypeStruct((Tp, H), x.dtype),
            grid_spec=pltpu.PrefetchScalarGridSpec(
                num_scalar_prefetch=0,
                grid=(num_token_tiles,),
                in_specs=[
                    pl.BlockSpec((tm, H), lambda i: (i, 0)),   # x tile
                    pl.BlockSpec((1, H), lambda i: (0, 0)),    # gamma (resident)
                    pl.BlockSpec((1, H), lambda i: (0, 0)),    # beta
                    pl.BlockSpec((H, F), lambda i: (0, 0)),    # W1 (resident)
                    pl.BlockSpec((1, F), lambda i: (0, 0)),    # b1
                    pl.BlockSpec((F, H), lambda i: (0, 0)),    # W2 (resident)
                    pl.BlockSpec((1, H), lambda i: (0, 0)),    # b2
                ],
                out_specs=pl.BlockSpec((tm, H), lambda i: (i, 0)),
            ),
            compiler_params=pltpu.CompilerParams(
                dimension_semantics=("parallel",),
                vmem_limit_bytes=_vmem_limit(footprint, vmem_cap),
            ),
            cost_estimate=cost,
        )(x2d, gamma2, beta2, w1, b1_2, w2, b2_2)
        return out2d[:T].reshape(B, S, H)

    # ------------------------------------------------------------------
    # Streamed path: tile F, pad it to a multiple of tf (padded columns of
    # W1/b1 and rows of W2 are zero => contribute exactly 0 to the output).
    # ------------------------------------------------------------------
    tf = 512 if big_vmem else 256           # multiples of 256 keep MXU full
    Fp = _round_up(F, tf)
    if Fp != F:
        w1 = jnp.pad(w1, ((0, 0), (0, Fp - F)))
        b1_2 = jnp.pad(b1_2, ((0, 0), (0, Fp - F)))
        w2 = jnp.pad(w2, ((0, Fp - F), (0, 0)))

    footprint = (4 * tm * H * act_bytes                  # x + out, double-buffered
                 + 2 * (H * tf + tf * H) * w_itemsize    # W1/W2 slices, double-buffered
                 + 2 * (tf + H) * 4                      # bias slices
                 + tm * H * act_bytes                    # xn scratch
                 + tm * H * 4                            # f32 accumulator
                 + tm * tf * 4)                          # h intermediate
    cost = pl.CostEstimate(
        flops=4 * Tp * H * Fp,
        transcendentals=Tp * Fp,
        bytes_accessed=int(
            2 * Tp * H * act_bytes
            + num_token_tiles * (w1.size + w2.size) * w_itemsize   # weight re-reads
            + (gamma.size + beta.size + b1.size + b2.size) * 4
        ),
    )
    out2d = pl.pallas_call(
        ffn_kernel_streamed,
        out_shape=jax.ShapeDtypeStruct((Tp, H), x.dtype),
        grid_spec=pltpu.PrefetchScalarGridSpec(
            num_scalar_prefetch=0,
            grid=(num_token_tiles, Fp // tf),
            in_specs=[
                pl.BlockSpec((tm, H), lambda i, j: (i, 0)),    # x tile (revisited over j)
                pl.BlockSpec((1, H), lambda i, j: (0, 0)),     # gamma
                pl.BlockSpec((1, H), lambda i, j: (0, 0)),     # beta
                pl.BlockSpec((H, tf), lambda i, j: (0, j)),    # W1 slice
                pl.BlockSpec((1, tf), lambda i, j: (0, j)),    # b1 slice
                pl.BlockSpec((tf, H), lambda i, j: (j, 0)),    # W2 slice
                pl.BlockSpec((1, H), lambda i, j: (0, 0)),     # b2
            ],
            out_specs=pl.BlockSpec((tm, H), lambda i, j: (i, 0)),   # resident over j
            scratch_shapes=[
                pltpu.VMEM((tm, H), x.dtype),        # cached LayerNorm output
                pltpu.VMEM((tm, H), jnp.float32),    # f32 accumulator
            ],
        ),
        compiler_params=pltpu.CompilerParams(
            dimension_semantics=("parallel", "arbitrary"),
            vmem_limit_bytes=_vmem_limit(footprint, vmem_cap),
        ),
        cost_estimate=cost,
    )(x2d, gamma2, beta2, w1, b1_2, w2, b2_2)
    return out2d[:T].reshape(B, S, H)


# ---------------------------------------------------------------------------
# Pure-JAX reference & demo
# ---------------------------------------------------------------------------

def reference_forward(x, gamma, beta, w1, b1, w2, b2):
    xf = x.astype(jnp.float32)
    mean = jnp.mean(xf, axis=-1, keepdims=True)
    var = jnp.mean((xf - mean) ** 2, axis=-1, keepdims=True)
    xn = (xf - mean) * jax.lax.rsqrt(var + LN_EPS)
    xn = xn * gamma.astype(jnp.float32) + beta.astype(jnp.float32)
    h = xn @ w1.astype(jnp.float32) + b1.astype(jnp.float32)
    h = h * jax.nn.sigmoid(h)
    return h @ w2.astype(jnp.float32) + b2.astype(jnp.float32)


if __name__ == "__main__":
    # Small shapes consistent with the module:
    #   batch=2, seq=8, hidden_size=128, intermediate_size=256
    B, S, H, F = 2, 8, 128, 256

    key = jax.random.PRNGKey(0)
    kx, kg, kb, kw1, kb1, kw2, kb2 = jax.random.split(key, 7)

    # bf16 activations/weights (MXU fast path); LN params & biases in f32.
    x = jax.random.normal(kx, (B, S, H), dtype=jnp.float32).astype(jnp.bfloat16)

    gamma = 1.0 + 0.01 * jax.random.normal(kg, (H,), dtype=jnp.float32)
    beta = 0.01 * jax.random.normal(kb, (H,), dtype=jnp.float32)

    # Linear weights stored as (in_features, out_features) == PyTorch weight.T
    w1 = (0.02 * jax.random.normal(kw1, (H, F), dtype=jnp.float32)).astype(jnp.bfloat16)
    b1 = 0.02 * jax.random.normal(kb1, (F,), dtype=jnp.float32)
    w2 = (0.02 * jax.random.normal(kw2, (F, H), dtype=jnp.float32)).astype(jnp.bfloat16)
    b2 = 0.02 * jax.random.normal(kb2, (H,), dtype=jnp.float32)

    y = te_optimal_net_forward(x, gamma, beta, w1, b1, w2, b2)
    y = jax.block_until_ready(y)
    assert y.shape == (B, S, H)

    y_ref = reference_forward(x, gamma, beta, w1, b1, w2, b2)
    # bf16 matmul operands (f32 accumulation) -> loosened tolerance vs f32 reference.
    assert jnp.allclose(y.astype(jnp.float32), y_ref, atol=2e-2, rtol=2e-2), \
        "mismatch vs reference"

    print("KERNEL_OK")
</pallas_src>

<mosaic_0001>
module attributes {stable_mosaic.version = 11 : i64} {
  func.func @ffn_kernel_resident(%arg0: i32, %arg1: memref<16x128xbf16, #tpu.memory_space<vmem>>, %arg2: memref<1x128xf32, #tpu.memory_space<vmem>>, %arg3: memref<1x128xf32, #tpu.memory_space<vmem>>, %arg4: memref<128x256xbf16, #tpu.memory_space<vmem>>, %arg5: memref<1x256xf32, #tpu.memory_space<vmem>>, %arg6: memref<256x128xbf16, #tpu.memory_space<vmem>>, %arg7: memref<1x128xf32, #tpu.memory_space<vmem>>, %arg8: memref<16x128xbf16, #tpu.memory_space<vmem>>) attributes {dimension_semantics = [#tpu.dimension_semantics<parallel>], iteration_bounds = array<i64: 1>, scalar_prefetch = 0 : i64, scratch_operands = 0 : i64, tpu.core_type = #tpu.core_type<tc>, window_params = [{transform_indices = @transform_0, window_bounds = array<i64: 16, 128>}, {pipeline_mode = #tpu.pipeline_mode<synchronous>, transform_indices = @transform_1, window_bounds = array<i64: 1, 128>}, {pipeline_mode = #tpu.pipeline_mode<synchronous>, transform_indices = @transform_2, window_bounds = array<i64: 1, 128>}, {pipeline_mode = #tpu.pipeline_mode<synchronous>, transform_indices = @transform_3, window_bounds = array<i64: 128, 256>}, {pipeline_mode = #tpu.pipeline_mode<synchronous>, transform_indices = @transform_4, window_bounds = array<i64: 1, 256>}, {pipeline_mode = #tpu.pipeline_mode<synchronous>, transform_indices = @transform_5, window_bounds = array<i64: 256, 128>}, {pipeline_mode = #tpu.pipeline_mode<synchronous>, transform_indices = @transform_6, window_bounds = array<i64: 1, 128>}, {transform_indices = @transform_7, window_bounds = array<i64: 16, 128>}]} {
    %c0 = arith.constant 0 : index
    %c0_0 = arith.constant 0 : index
    %0 = vector.load %arg1[%c0, %c0_0] : memref<16x128xbf16, #tpu.memory_space<vmem>>, vector<16x128xbf16>
    %1 = arith.extf %0 : vector<16x128xbf16> to vector<16x128xf32>
    %cst = arith.constant dense<0.000000e+00> : vector<16xf32>
    %2 = vector.multi_reduction <add>, %1, %cst [1] : vector<16x128xf32> to vector<16xf32>
    %3 = vector.shape_cast %2 : vector<16xf32> to vector<16x1xf32>
    %cst_1 = arith.constant 1.280000e+02 : f32
    %4 = vector.broadcast %cst_1 : f32 to vector<16x1xf32>
    %5 = arith.divf %3, %4 : vector<16x1xf32>
    %6 = vector.broadcast %5 : vector<16x1xf32> to vector<16x128xf32>
    %7 = arith.subf %1, %6 : vector<16x128xf32>
    %8 = arith.mulf %7, %7 : vector<16x128xf32>
    %cst_2 = arith.constant dense<0.000000e+00> : vector<16xf32>
    %9 = vector.multi_reduction <add>, %8, %cst_2 [1] : vector<16x128xf32> to vector<16xf32>
    %10 = vector.shape_cast %9 : vector<16xf32> to vector<16x1xf32>
    %cst_3 = arith.constant 1.280000e+02 : f32
    %11 = vector.broadcast %cst_3 : f32 to vector<16x1xf32>
    %12 = arith.divf %10, %11 : vector<16x1xf32>
    %cst_4 = arith.constant 9.99999974E-6 : f32
    %13 = vector.broadcast %cst_4 : f32 to vector<16x1xf32>
    %14 = arith.addf %12, %13 : vector<16x1xf32>
    %15 = math.rsqrt %14 : vector<16x1xf32>
    %16 = vector.broadcast %15 : vector<16x1xf32> to vector<16x128xf32>
    %17 = arith.mulf %7, %16 : vector<16x128xf32>
    %c0_5 = arith.constant 0 : index
    %c0_6 = arith.constant 0 : index
    %18 = vector.load %arg2[%c0_5, %c0_6] : memref<1x128xf32, #tpu.memory_space<vmem>>, vector<1x128xf32>
    %19 = vector.broadcast %18 : vector<1x128xf32> to vector<16x128xf32>
    %20 = arith.mulf %17, %19 : vector<16x128xf32>
    %c0_7 = arith.constant 0 : index
    %c0_8 = arith.constant 0 : index
    %21 = vector.load %arg3[%c0_7, %c0_8] : memref<1x128xf32, #tpu.memory_space<vmem>>, vector<1x128xf32>
    %22 = vector.broadcast %21 : vector<1x128xf32> to vector<16x128xf32>
    %23 = arith.addf %20, %22 : vector<16x128xf32>
    %24 = arith.truncf %23 : vector<16x128xf32> to vector<16x128xbf16>
    %c0_9 = arith.constant 0 : index
    %c0_10 = arith.constant 0 : index
    %25 = vector.load %arg4[%c0_9, %c0_10] : memref<128x256xbf16, #tpu.memory_space<vmem>>, vector<128x256xbf16>
    %cst_11 = arith.constant dense<0.000000e+00> : vector<16x256xf32>
    %26 = tpu.matmul %24, %25, %cst_11 {dimension_numbers = #tpu.dot_dimension_numbers<[1], [0], [0], [1], [0, 0, 1, 1], [], []>} : vector<16x128xbf16>, vector<128x256xbf16>, vector<16x256xf32> -> vector<16x256xf32>
    %c0_12 = arith.constant 0 : index
    %c0_13 = arith.constant 0 : index
    %27 = vector.load %arg5[%c0_12, %c0_13] : memref<1x256xf32, #tpu.memory_space<vmem>>, vector<1x256xf32>
    %28 = vector.broadcast %27 : vector<1x256xf32> to vector<16x256xf32>
    %29 = arith.addf %26, %28 : vector<16x256xf32>
    %30 = arith.negf %29 : vector<16x256xf32>
    %31 = math.exp %30 : vector<16x256xf32>
    %cst_14 = arith.constant 1.000000e+00 : f32
    %32 = vector.broadcast %cst_14 : f32 to vector<16x256xf32>
    %33 = arith.addf %32, %31 : vector<16x256xf32>
    %34 = arith.divf %32, %33 : vector<16x256xf32>
    %35 = arith.mulf %29, %34 : vector<16x256xf32>
    %36 = arith.truncf %35 : vector<16x256xf32> to vector<16x256xbf16>
    %c0_15 = arith.constant 0 : index
    %c0_16 = arith.constant 0 : index
    %37 = vector.load %arg6[%c0_15, %c0_16] : memref<256x128xbf16, #tpu.memory_space<vmem>>, vector<256x128xbf16>
    %cst_17 = arith.constant dense<0.000000e+00> : vector<16x128xf32>
    %38 = tpu.matmul %36, %37, %cst_17 {dimension_numbers = #tpu.dot_dimension_numbers<[1], [0], [0], [1], [0, 0, 1, 1], [], []>} : vector<16x256xbf16>, vector<256x128xbf16>, vector<16x128xf32> -> vector<16x128xf32>
    %c0_18 = arith.constant 0 : index
    %c0_19 = arith.constant 0 : index
    %39 = vector.load %arg7[%c0_18, %c0_19] : memref<1x128xf32, #tpu.memory_space<vmem>>, vector<1x128xf32>
    %40 = vector.broadcast %39 : vector<1x128xf32> to vector<16x128xf32>
    %41 = arith.addf %38, %40 : vector<16x128xf32>
    %42 = arith.truncf %41 : vector<16x128xf32> to vector<16x128xbf16>
    %c0_20 = arith.constant 0 : index
    %c0_21 = arith.constant 0 : index
    %43 = vector.load %arg8[%c0_20, %c0_21] : memref<16x128xbf16, #tpu.memory_space<vmem>>, vector<16x128xbf16>
    tpu.vector_store %arg8[%c0_20, %c0_21], %42 {strides = array<i32>} : memref<16x128xbf16, #tpu.memory_space<vmem>>, vector<16x128xbf16>,
    return
  }
  func.func @transform_0(%arg0: i32) -> (i32, i32) {
    %c0_i32 = arith.constant 0 : i32
    %c0_i32_0 = arith.constant 0 : i32
    return %arg0, %c0_i32 : i32, i32
  }
  func.func @transform_1(%arg0: i32) -> (i32, i32) {
    %c0_i32 = arith.constant 0 : i32
    %c0_i32_0 = arith.constant 0 : i32
    %c0_i32_1 = arith.constant 0 : i32
    return %c0_i32, %c0_i32_0 : i32, i32
  }
  func.func @transform_2(%arg0: i32) -> (i32, i32) {
    %c0_i32 = arith.constant 0 : i32
    %c0_i32_0 = arith.constant 0 : i32
    %c0_i32_1 = arith.constant 0 : i32
    return %c0_i32, %c0_i32_0 : i32, i32
  }
  func.func @transform_3(%arg0: i32) -> (i32, i32) {
    %c0_i32 = arith.constant 0 : i32
    %c0_i32_0 = arith.constant 0 : i32
    %c0_i32_1 = arith.constant 0 : i32
    return %c0_i32, %c0_i32_0 : i32, i32
  }
  func.func @transform_4(%arg0: i32) -> (i32, i32) {
    %c0_i32 = arith.constant 0 : i32
    %c0_i32_0 = arith.constant 0 : i32
    %c0_i32_1 = arith.constant 0 : i32
    return %c0_i32, %c0_i32_0 : i32, i32
  }
  func.func @transform_5(%arg0: i32) -> (i32, i32) {
    %c0_i32 = arith.constant 0 : i32
    %c0_i32_0 = arith.constant 0 : i32
    %c0_i32_1 = arith.constant 0 : i32
    return %c0_i32, %c0_i32_0 : i32, i32
  }
  func.func @transform_6(%arg0: i32) -> (i32, i32) {
    %c0_i32 = arith.constant 0 : i32
    %c0_i32_0 = arith.constant 0 : i32
    %c0_i32_1 = arith.constant 0 : i32
    return %c0_i32, %c0_i32_0 : i32, i32
  }
  func.func @transform_7(%arg0: i32) -> (i32, i32) {
    %c0_i32 = arith.constant 0 : i32
    %c0_i32_0 = arith.constant 0 : i32
    return %arg0, %c0_i32 : i32, i32
  }
}

</mosaic_0001>

<llo_original>
// kernel: tpu_custom_call.1
$region0: #{tpu_custom_call.1}
  #allocation0 [shape = 'u32[]', space=smem, size = 0x4, offset = 0x4, fixed_abs, tag = 'smem constant byte address 0x4 - core index']
  #allocation1 [shape = 'u32[144,128]{1,0:T(1,128)}', space=vmem, size = 0x12000, scoped, tag = 'internal scratch']
  %s0 = inlined_call_operand.hbm [shape: bf16[16,128], index: 0, kind: input, shape index: {}]
  %s1 = inlined_call_operand.vmem [shape: f32[1,128], index: 1, kind: input, shape index: {}]
  %s2 = inlined_call_operand.hbm [shape: f32[1,128], index: 2, kind: input, shape index: {}]
  %s3 = inlined_call_operand.hbm [shape: bf16[128,256], index: 3, kind: input, shape index: {}]
  %s4 = inlined_call_operand.vmem [shape: f32[1,256], index: 4, kind: input, shape index: {}]
  %s5 = inlined_call_operand.hbm [shape: bf16[256,128], index: 5, kind: input, shape index: {}]
  %s6 = inlined_call_operand.vmem [shape: f32[1,128], index: 6, kind: input, shape index: {}]
  %s7 = inlined_call_operand.hbm [shape: bf16[16,128], index: 7, kind: output, shape index: {}]
  %s8 = sld [smem:[#allocation0]]
  $region54: #{tpu_custom_call.1} parent=0
    _
  %s10 = ssub.s32 1, %s8
  %s11 = scalar_select 0, %s10, %s8
  $region1: #{tpu_custom_call.1} parent=0
    #allocation2 [shape = 'u8[4096]{0}', space=vmem, size = 0x1000, scoped, tag = 'input window, operand 0, single buffered']
    #allocation3 [shape = 's32[1]{0}', space=sflag, size = 0x4, scoped, tag = 'scoped memory for tpu_custom_call.1']
    #allocation4 [shape = 's32[1]{0}', space=sflag, size = 0x4, scoped, tag = 'scoped memory for tpu_custom_call.1']
    #allocation5 [shape = 'u8[512]{0}', space=vmem, size = 0x400, scoped, tag = 'input window, operand 2, single buffered']
    #allocation6 [shape = 's32[1]{0}', space=sflag, size = 0x4, scoped, tag = 'scoped memory for tpu_custom_call.1']
    #allocation7 [shape = 'u8[65536]{0}', space=vmem, size = 0x10000, scoped, tag = 'input window, operand 3, single buffered']
    #allocation8 [shape = 'u8[65536]{0}', space=vmem, size = 0x10000, scoped, tag = 'input window, operand 5, single buffered']
    #allocation9 [shape = 's32[1]{0}', space=sflag, size = 0x4, scoped, tag = 'scoped memory for tpu_custom_call.1']
    #allocation10 [shape = 'u8[4096]{0}', space=vmem, size = 0x1000, scoped, tag = 'output window, operand 0, single buffered']
    %12 = vsyncpa [#allocation3], 0
    %13 = vsyncpa [#allocation6], 0
    %14 = vsyncpa [#allocation9], 0
    %15 = vsyncpa [#allocation4], 0
    // Predicated region
    $region2: #{tpu_custom_call.1} parent=1 // pred_check
      _
    $region3: #{tpu_custom_call.1} parent=1 // pred_check_branch
      %17 = sbr.rel (0) target = $region5
    $region4: #{tpu_custom_call.1} parent=1 // pred_region
      %s19 = ssub.s32 128, 128
      %20 = vsyncadd [#allocation3], %s19
      %s21 = sshll.u32 [#allocation2], 4
      %s22 = int_to_ptr.vmem [resolvable:$true] %s21
      %27 = dma.hbm_to_vmem [thread:$0]  %s0, 128, %s22, [#allocation3], 64, 64, 4
    $region5: #{tpu_custom_call.1} parent=1 // pred_fallthru
      _
    // Predicated region
    $region6: #{tpu_custom_call.1} parent=1 // pred_check
      _
    $region7: #{tpu_custom_call.1} parent=1 // pred_check_branch
      %29 = sbr.rel (0) target = $region9
    $region8: #{tpu_custom_call.1} parent=1 // pred_region
      _
    $region9: #{tpu_custom_call.1} parent=1 // pred_fallthru
      _
    // Predicated region
    $region10: #{tpu_custom_call.1} parent=1 // pred_check
      _
    $region11: #{tpu_custom_call.1} parent=1 // pred_check_branch
      %31 = sbr.rel (0) target = $region13
    $region12: #{tpu_custom_call.1} parent=1 // pred_region
      %s33 = ssub.s32 16, 16
      %34 = vsyncadd [#allocation6], %s33
      %s36 = sshll.u32 [#allocation5], 4
      %s37 = int_to_ptr.vmem [resolvable:$true] %s36
      %39 = dma.hbm_to_vmem [thread:$0]  %s2, 16, %s37, [#allocation6]
    $region13: #{tpu_custom_call.1} parent=1 // pred_fallthru
      _
    // Predicated region
    $region14: #{tpu_custom_call.1} parent=1 // pred_check
      _
    $region15: #{tpu_custom_call.1} parent=1 // pred_check_branch
      %41 = sbr.rel (0) target = $region17
    $region16: #{tpu_custom_call.1} parent=1 // pred_region
      %s43 = ssub.s32 2048, 2048
      %44 = vsyncadd [#allocation6], %s43
      %s45 = sshll.u32 [#allocation7], 4
      %s46 = int_to_ptr.vmem [resolvable:$true] %s45
      %51 = dma.hbm_to_vmem [thread:$0]  %s3, 2048, %s46, [#allocation6], 128, 128, 8
    $region17: #{tpu_custom_call.1} parent=1 // pred_fallthru
      _
    // Predicated region
    $region18: #{tpu_custom_call.1} parent=1 // pred_check
      _
    $region19: #{tpu_custom_call.1} parent=1 // pred_check_branch
      %53 = sbr.rel (0) target = $region21
    $region20: #{tpu_custom_call.1} parent=1 // pred_region
      _
    $region21: #{tpu_custom_call.1} parent=1 // pred_fallthru
      _
    // Predicated region
    $region22: #{tpu_custom_call.1} parent=1 // pred_check
      _
    $region23: #{tpu_custom_call.1} parent=1 // pred_check_branch
      %55 = sbr.rel (0) target = $region25
    $region24: #{tpu_custom_call.1} parent=1 // pred_region
      %s57 = ssub.s32 2048, 2048
      %58 = vsyncadd [#allocation9], %s57
      %s59 = sshll.u32 [#allocation8], 4
      %s60 = int_to_ptr.vmem [resolvable:$true] %s59
      %65 = dma.hbm_to_vmem [thread:$0]  %s5, 2048, %s60, [#allocation9], 64, 64, 4
    $region25: #{tpu_custom_call.1} parent=1 // pred_fallthru
      _
    // Predicated region
    $region26: #{tpu_custom_call.1} parent=1 // pred_check
      _
    $region27: #{tpu_custom_call.1} parent=1 // pred_check_branch
      %67 = sbr.rel (0) target = $region29
    $region28: #{tpu_custom_call.1} parent=1 // pred_region
      _
    $region29: #{tpu_custom_call.1} parent=1 // pred_fallthru
      _
    // Predicated region
    $region30: #{tpu_custom_call.1} parent=1 // pred_check
      _
    $region31: #{tpu_custom_call.1} parent=1 // pred_check_branch
      %69 = sbr.rel (0) target = $region33
    $region32: #{tpu_custom_call.1} parent=1 // pred_region
      %70 = dma.done [#allocation3], 128
    $region33: #{tpu_custom_call.1} parent=1 // pred_fallthru
      _
    // Predicated region
    $region34: #{tpu_custom_call.1} parent=1 // pred_check
      _
    $region35: #{tpu_custom_call.1} parent=1 // pred_check_branch
      %72 = sbr.rel (0) target = $region37
    $region36: #{tpu_custom_call.1} parent=1 // pred_region
      %73 = dma.done [#allocation6], 16
    $region37: #{tpu_custom_call.1} parent=1 // pred_fallthru
      _
    // Predicated region
    $region38: #{tpu_custom_call.1} parent=1 // pred_check
      _
    $region39: #{tpu_custom_call.1} parent=1 // pred_check_branch
      %75 = sbr.rel (0) target = $region41
    $region40: #{tpu_custom_call.1} parent=1 // pred_region
      %76 = dma.done [#allocation6], 2048
    $region41: #{tpu_custom_call.1} parent=1 // pred_fallthru
      _
    // Predicated region
    $region42: #{tpu_custom_call.1} parent=1 // pred_check
      _
    $region43: #{tpu_custom_call.1} parent=1 // pred_check_branch
      %78 = sbr.rel (0) target = $region45
    $region44: #{tpu_custom_call.1} parent=1 // pred_region
      %79 = dma.done [#allocation9], 2048
    $region45: #{tpu_custom_call.1} parent=1 // pred_fallthru
      _
    %v81 = vld [vmem:[#allocation2] sm:$0xf]
    %v82 = vld [vmem:[#allocation2 + $0x4] sm:$0xf]
    %v83 = vunpack.c.l.bf16 %v81
    %v84 = vunpack.c.l.bf16 %v82
    %85 = vadd.xlane.f32.xlu0 %v83
    %v86 = vpop.xlane.xlu0 %85
    %87 = vadd.xlane.f32.xlu0 %v84
    %v88 = vpop.xlane.xlu0 %87
    %v89 = vrcp.pop 128.0
    %v90 = vmul.f32 %v86, %v89
    %v91 = vmul.f32 %v88, %v89
    %v92 = vsub.f32 %v83, %v90
    %v93 = vsub.f32 %v84, %v91
    %v94 = vmul.f32 %v92, %v92
    %v95 = vmul.f32 %v93, %v93
    %96 = vadd.xlane.f32.xlu0 %v94
    %v97 = vpop.xlane.xlu0 %96
    %98 = vadd.xlane.f32.xlu0 %v95
    %v99 = vpop.xlane.xlu0 %98
    %v100 = vmul.f32 %v97, %v89
    %v101 = vmul.f32 %v99, %v89
    %v102 = vadd.f32 %v100, 1e-05
    %v103 = vadd.f32 %v101, 1e-05
    %v104 = vrsqrt.pop %v102
    %v105 = vrsqrt.pop %v103
    %v106 = vmul.f32 %v92, %v104
    %v107 = vmul.f32 %v93, %v105
    %v108 = vld [vmem:[%s1] sm:$0x1]
    %v110 = vlaneseq
    %v111 = vshrl.u32 %v110, 7
    %v112 = vsub.s32 0, %v111
    %v113 = vrot.slane %v108, %v112
    %v115 = vmul.f32 %v106, %v113
    %v116 = vmul.f32 %v107, %v113
    %v117 = vld [vmem:[#allocation5] sm:$0x1]
    %v119 = vlaneseq
    %v120 = vshrl.u32 %v119, 7
    %v121 = vsub.s32 0, %v120
    %v122 = vrot.slane %v117, %v121
    %v124 = vadd.f32 %v115, %v122
    %v125 = vadd.f32 %v116, %v122
    %v126 = vpack.c.bf16 %v125, %v124
    %v127 = vld [vmem:[#allocation7] sm:$0xff]
    %v128 = vld [vmem:[#allocation7 + $0x8] sm:$0xff]
    %v129 = vld [vmem:[#allocation7 + $0x10] sm:$0xff]
    %v130 = vld [vmem:[#allocation7 + $0x18] sm:$0xff]
    %v131 = vld [vmem:[#allocation7 + $0x20] sm:$0xff]
    %v132 = vld [vmem:[#allocation7 + $0x28] sm:$0xff]
    %v133 = vld [vmem:[#allocation7 + $0x30] sm:$0xff]
    %v134 = vld [vmem:[#allocation7 + $0x38] sm:$0xff]
    %v135 = vld [vmem:[#allocation7 + $0x40] sm:$0xff]
    %v136 = vld [vmem:[#allocation7 + $0x48] sm:$0xff]
    %v137 = vld [vmem:[#allocation7 + $0x50] sm:$0xff]
    %v138 = vld [vmem:[#allocation7 + $0x58] sm:$0xff]
    %v139 = vld [vmem:[#allocation7 + $0x60] sm:$0xff]
    %v140 = vld [vmem:[#allocation7 + $0x68] sm:$0xff]
    %v141 = vld [vmem:[#allocation7 + $0x70] sm:$0xff]
    %v142 = vld [vmem:[#allocation7 + $0x78] sm:$0xff]
    %v143 = vld [vmem:[%s4] sm:$0x3]
    %v145 = vlaneseq
    %v146 = vshrl.u32 %v145, 7
    %v147 = vsub.s32 0, %v146
    %v148 = vrot.slane %v143, %v147
    %v149 = vlaneseq
    %v150 = vshrl.u32 %v149, 7
    %v151 = vsub.s32 1, %v150
    %v152 = vrot.slane %v143, %v151
    %v171 = vunpack.c.l.b16 %v127
    %v172 = vunpack.c.h.b16 %v127
    %v173 = vunpack.c.l.b16 %v128
    %v174 = vunpack.c.h.b16 %v128
    %v175 = vunpack.c.l.b16 %v129
    %v176 = vunpack.c.h.b16 %v129
    %v177 = vunpack.c.l.b16 %v130
    %v178 = vunpack.c.h.b16 %v130
    %v179 = vunpack.c.l.b16 %v131
    %v180 = vunpack.c.h.b16 %v131
    %v181 = vunpack.c.l.b16 %v132
    %v182 = vunpack.c.h.b16 %v132
    %v183 = vunpack.c.l.b16 %v133
    %v184 = vunpack.c.h.b16 %v133
    %v185 = vunpack.c.l.b16 %v134
    %v186 = vunpack.c.h.b16 %v134
    %v187 = vunpack.c.l.b16 %v135
    %v188 = vunpack.c.h.b16 %v135
    %v189 = vunpack.c.l.b16 %v136
    %v190 = vunpack.c.h.b16 %v136
    %v191 = vunpack.c.l.b16 %v137
    %v192 = vunpack.c.h.b16 %v137
    %v193 = vunpack.c.l.b16 %v138
    %v194 = vunpack.c.h.b16 %v138
    %v195 = vunpack.c.l.b16 %v139
    %v196 = vunpack.c.h.b16 %v139
    %v197 = vunpack.c.l.b16 %v140
    %v198 = vunpack.c.h.b16 %v140
    %v199 = vunpack.c.l.b16 %v141
    %v200 = vunpack.c.h.b16 %v141
    %v201 = vunpack.c.l.b16 %v142
    %v202 = vunpack.c.h.b16 %v142
    %v203 = vpack.c.b16 %v173, %v171
    %v204 = vpack.c.b16 %v174, %v172
    %v205 = vpack.c.b16 %v177, %v175
    %v206 = vpack.c.b16 %v178, %v176
    %v207 = vpack.c.b16 %v181, %v179
    %v208 = vpack.c.b16 %v182, %v180
    %v209 = vpack.c.b16 %v185, %v183
    %v210 = vpack.c.b16 %v186, %v184
    %v211 = vpack.c.b16 %v189, %v187
    %v212 = vpack.c.b16 %v190, %v188
    %v213 = vpack.c.b16 %v193, %v191
    %v214 = vpack.c.b16 %v194, %v192
    %v215 = vpack.c.b16 %v197, %v195
    %v216 = vpack.c.b16 %v198, %v196
    %v217 = vpack.c.b16 %v201, %v199
    %v218 = vpack.c.b16 %v202, %v200
    %235 = vmatprep.subr.bf16.mxu0 %v218
    %236 = vmatpush1.bf16.msra.mxu0 %v217
    %237 = vmatprep.subr.bf16.mxu0 %v216
    %238 = vmatpush1.bf16.msra.mxu0 %v215
    %239 = vmatprep.subr.bf16.mxu0 %v214
    %240 = vmatpush1.bf16.msra.mxu0 %v213
    %241 = vmatprep.subr.bf16.mxu0 %v212
    %242 = vmatpush1.bf16.msra.mxu0 %v211
    %243 = vmatprep.subr.bf16.mxu0 %v210
    %244 = vmatpush1.bf16.msra.mxu0 %v209
    %245 = vmatprep.subr.bf16.mxu0 %v208
    %246 = vmatpush1.bf16.msra.mxu0 %v207
    %247 = vmatprep.subr.bf16.mxu0 %v206
    %248 = vmatpush1.bf16.msra.mxu0 %v205
    %249 = vmatprep.subr.bf16.mxu0 %v204
    %250 = vmatpush1.bf16.msra.mxu0 %v203
    %251 = vmatprep.subr.bf16.mxu0 0
    %252 = vmatpush2.bf16.msra.mxu0 0
    %253 = vmatprep.subr.bf16.mxu0 0
    %254 = vmatpush2.bf16.msra.mxu0 0
    %255 = vmatprep.subr.bf16.mxu0 0
    %256 = vmatpush2.bf16.msra.mxu0 0
    %257 = vmatprep.subr.bf16.mxu0 0
    %258 = vmatpush2.bf16.msra.mxu0 0
    %259 = vmatprep.subr.bf16.mxu0 0
    %260 = vmatpush2.bf16.msra.mxu0 0
    %261 = vmatprep.subr.bf16.mxu0 0
    %262 = vmatpush2.bf16.msra.mxu0 0
    %263 = vmatprep.subr.bf16.mxu0 0
    %264 = vmatpush2.bf16.msra.mxu0 0
    %265 = vmatprep.subr.bf16.mxu0 0
    %266 = vmatpush2.bf16.msra.mxu0 0
    %267 = vmatprep.mubr.bf16.mxu0 0
    %268 = vmatmul.mubr.bf16.gmra.mxu0 %v126
    %v269 = vpop.f32.mrf.mxu0
    %v270 = vadd.f32 %v148, %v269
    %v271 = vpop.f32.mrf.mxu0
    %v272 = vadd.f32 %v152, %v271
    %v273 = vpop.f32.mrf.mxu0
    %v274 = vadd.f32 %v148, %v273
    %v275 = vpop.f32.mrf.mxu0
    %v276 = vadd.f32 %v152, %v275
    %277 = vdwg.mxu0
    %v278 = vxor.u32 %v270, 2147483648
    %v279 = vxor.u32 %v272, 2147483648
    %v280 = vxor.u32 %v274, 2147483648
    %v281 = vxor.u32 %v276, 2147483648
    %v282 = vmul.f32 %v278, 1.442695
    %v283 = vpow.pop %v282
    %v284 = vmul.f32 %v279, 1.442695
    %v285 = vpow.pop %v284
    %v286 = vmul.f32 %v280, 1.442695
    %v287 = vpow.pop %v286
    %v288 = vmul.f32 %v281, 1.442695
    %v289 = vpow.pop %v288
    %v290 = vadd.f32 %v283, 1.0
    %v291 = vadd.f32 %v285, 1.0
    %v292 = vadd.f32 %v287, 1.0
    %v293 = vadd.f32 %v289, 1.0
    %v294 = vrcp.pop %v290
    %v295 = vmul.f32 1.0, %v294
    %v296 = vrcp.pop %v291
    %v297 = vmul.f32 1.0, %v296
    %v298 = vrcp.pop %v292
    %v299 = vmul.f32 1.0, %v298
    %v300 = vrcp.pop %v293
    %v301 = vmul.f32 1.0, %v300
    %v302 = vmul.f32 %v270, %v295
    %v303 = vmul.f32 %v272, %v297
    %v304 = vmul.f32 %v274, %v299
    %v305 = vmul.f32 %v276, %v301
    %v306 = vpack.c.bf16 %v304, %v302
    %v307 = vpack.c.bf16 %v305, %v303
    %v308 = vld [vmem:[#allocation8] sm:$0xf]
    %v309 = vld [vmem:[#allocation8 + $0x4] sm:$0xf]
    %v310 = vld [vmem:[#allocation8 + $0x8] sm:$0xf]
    %v311 = vld [vmem:[#allocation8 + $0xc] sm:$0xf]
    %v312 = vld [vmem:[#allocation8 + $0x10] sm:$0xf]
    %v313 = vld [vmem:[#allocation8 + $0x14] sm:$0xf]
    %v314 = vld [vmem:[#allocation8 + $0x18] sm:$0xf]
    %v315 = vld [vmem:[#allocation8 + $0x1c] sm:$0xf]
    %v316 = vld [vmem:[#allocation8 + $0x20] sm:$0xf]
    %v317 = vld [vmem:[#allocation8 + $0x24] sm:$0xf]
    %v318 = vld [vmem:[#allocation8 + $0x28] sm:$0xf]
    %v319 = vld [vmem:[#allocation8 + $0x2c] sm:$0xf]
    %v320 = vld [vmem:[#allocation8 + $0x30] sm:$0xf]
    %v321 = vld [vmem:[#allocation8 + $0x34] sm:$0xf]
    %v322 = vld [vmem:[#allocation8 + $0x38] sm:$0xf]
    %v323 = vld [vmem:[#allocation8 + $0x3c] sm:$0xf]
    %v324 = vld [vmem:[#allocation8 + $0x40] sm:$0xf]
    %v325 = vld [vmem:[#allocation8 + $0x44] sm:$0xf]
    %v326 = vld [vmem:[#allocation8 + $0x48] sm:$0xf]
    %v327 = vld [vmem:[#allocation8 + $0x4c] sm:$0xf]
    %v328 = vld [vmem:[#allocation8 + $0x50] sm:$0xf]
    %v329 = vld [vmem:[#allocation8 + $0x54] sm:$0xf]
    %v330 = vld [vmem:[#allocation8 + $0x58] sm:$0xf]
    %v331 = vld [vmem:[#allocation8 + $0x5c] sm:$0xf]
    %v332 = vld [vmem:[#allocation8 + $0x60] sm:$0xf]
    %v333 = vld [vmem:[#allocation8 + $0x64] sm:$0xf]
    %v334 = vld [vmem:[#allocation8 + $0x68] sm:$0xf]
    %v335 = vld [vmem:[#allocation8 + $0x6c] sm:$0xf]
    %v336 = vld [vmem:[#allocation8 + $0x70] sm:$0xf]
    %v337 = vld [vmem:[#allocation8 + $0x74] sm:$0xf]
    %v338 = vld [vmem:[#allocation8 + $0x78] sm:$0xf]
    %v339 = vld [vmem:[#allocation8 + $0x7c] sm:$0xf]
    %v340 = vld [vmem:[%s6] sm:$0x1]
    %v342 = vlaneseq
    %v343 = vshrl.u32 %v342, 7
    %v344 = vsub.s32 0, %v343
    %v345 = vrot.slane %v340, %v344
    %v379 = vunpack.c.l.b16 %v308
    %v380 = vunpack.c.l.b16 %v309
    %v381 = vunpack.c.l.b16 %v310
    %v382 = vunpack.c.l.b16 %v311
    %v383 = vunpack.c.l.b16 %v312
    %v384 = vunpack.c.l.b16 %v313
    %v385 = vunpack.c.l.b16 %v314
    %v386 = vunpack.c.l.b16 %v315
    %v387 = vunpack.c.l.b16 %v316
    %v388 = vunpack.c.l.b16 %v317
    %v389 = vunpack.c.l.b16 %v318
    %v390 = vunpack.c.l.b16 %v319
    %v391 = vunpack.c.l.b16 %v320
    %v392 = vunpack.c.l.b16 %v321
    %v393 = vunpack.c.l.b16 %v322
    %v394 = vunpack.c.l.b16 %v323
    %v395 = vunpack.c.l.b16 %v324
    %v396 = vunpack.c.l.b16 %v325
    %v397 = vunpack.c.l.b16 %v326
    %v398 = vunpack.c.l.b16 %v327
    %v399 = vunpack.c.l.b16 %v328
    %v400 = vunpack.c.l.b16 %v329
    %v401 = vunpack.c.l.b16 %v330
    %v402 = vunpack.c.l.b16 %v331
    %v403 = vunpack.c.l.b16 %v332
    %v404 = vunpack.c.l.b16 %v333
    %v405 = vunpack.c.l.b16 %v334
    %v406 = vunpack.c.l.b16 %v335
    %v407 = vunpack.c.l.b16 %v336
    %v408 = vunpack.c.l.b16 %v337
    %v409 = vunpack.c.l.b16 %v338
    %v410 = vunpack.c.l.b16 %v339
    %v411 = vpack.c.b16 %v380, %v379
    %v412 = vpack.c.b16 %v382, %v381
    %v413 = vpack.c.b16 %v384, %v383
    %v414 = vpack.c.b16 %v386, %v385
    %v415 = vpack.c.b16 %v388, %v387
    %v416 = vpack.c.b16 %v390, %v389
    %v417 = vpack.c.b16 %v392, %v391
    %v418 = vpack.c.b16 %v394, %v393
    %v419 = vpack.c.b16 %v396, %v395
    %v420 = vpack.c.b16 %v398, %v397
    %v421 = vpack.c.b16 %v400, %v399
    %v422 = vpack.c.b16 %v402, %v401
    %v423 = vpack.c.b16 %v404, %v403
    %v424 = vpack.c.b16 %v406, %v405
    %v425 = vpack.c.b16 %v408, %v407
    %v426 = vpack.c.b16 %v410, %v409
    %443 = vmatprep.subr.bf16.mxu0 0
    %444 = vmatpush1.bf16.msra.mxu0 %v418
    %445 = vmatprep.subr.bf16.mxu0 0
    %446 = vmatpush1.bf16.msra.mxu0 %v417
    %447 = vmatprep.subr.bf16.mxu0 0
    %448 = vmatpush1.bf16.msra.mxu0 %v416
    %449 = vmatprep.subr.bf16.mxu0 0
    %450 = vmatpush1.bf16.msra.mxu0 %v415
    %451 = vmatprep.subr.bf16.mxu0 0
    %452 = vmatpush1.bf16.msra.mxu0 %v414
    %453 = vmatprep.subr.bf16.mxu0 0
    %454 = vmatpush1.bf16.msra.mxu0 %v413
    %455 = vmatprep.subr.bf16.mxu0 0
    %456 = vmatpush1.bf16.msra.mxu0 %v412
    %457 = vmatprep.subr.bf16.mxu0 0
    %458 = vmatpush1.bf16.msra.mxu0 %v411
    %459 = vmatprep.subr.bf16.mxu0 0
    %460 = vmatpush2.bf16.msra.mxu0 %v426
    %461 = vmatprep.subr.bf16.mxu0 0
    %462 = vmatpush2.bf16.msra.mxu0 %v425
    %463 = vmatprep.subr.bf16.mxu0 0
    %464 = vmatpush2.bf16.msra.mxu0 %v424
    %465 = vmatprep.subr.bf16.mxu0 0
    %466 = vmatpush2.bf16.msra.mxu0 %v423
    %467 = vmatprep.subr.bf16.mxu0 0
    %468 = vmatpush2.bf16.msra.mxu0 %v422
    %469 = vmatprep.subr.bf16.mxu0 0
    %470 = vmatpush2.bf16.msra.mxu0 %v421
    %471 = vmatprep.subr.bf16.mxu0 0
    %472 = vmatpush2.bf16.msra.mxu0 %v420
    %473 = vmatprep.subr.bf16.mxu0 0
    %474 = vmatpush2.bf16.msra.mxu0 %v419
    %475 = vmatprep.mubr.bf16.mxu0 %v307
    %476 = vmatmul.mubr.bf16.gmra.mxu0 %v306
    %v477 = vpop.f32.mrf.mxu0
    %v478 = vadd.f32 %v345, %v477
    %v479 = vpop.f32.mrf.mxu0
    %v480 = vpop.f32.mrf.mxu0
    %v481 = vadd.f32 %v345, %v480
    %v482 = vpop.f32.mrf.mxu0
    %483 = vdwg.mxu0
    %v484 = vpack.c.bf16 %v481, %v478
    %v486 = vunpack.c.l.b16 %v484
    %v487 = vunpack.c.h.b16 %v484
    %v488 = vpack.c.b16 %v486, %v486
    %v489 = vpack.c.b16 %v487, %v487
    %492 = vst [vmem:[#allocation10] sm:$0xf] %v488
    %493 = vst [vmem:[#allocation10 + $0x4] sm:$0xf] %v489
    // Predicated region
    $region46: #{tpu_custom_call.1} parent=1 // pred_check
      _
    $region47: #{tpu_custom_call.1} parent=1 // pred_check_branch
      %495 = sbr.rel (0) target = $region49
    $region48: #{tpu_custom_call.1} parent=1 // pred_region
      %s497 = ssub.s32 128, 128
      %498 = vsyncadd [#allocation4], %s497
      %s499 = sshll.u32 [#allocation10], 4
      %s500 = int_to_ptr.vmem [resolvable:$true] %s499
      %505 = dma.vmem_to_hbm [thread:$0]  %s500, 128, %s7, [#allocation4], 64, 64, 4
    $region49: #{tpu_custom_call.1} parent=1 // pred_fallthru
      _
    // Predicated region
    $region50: #{tpu_custom_call.1} parent=1 // pred_check
      _
    $region51: #{tpu_custom_call.1} parent=1 // pred_check_branch
      %507 = sbr.rel (0) target = $region53
    $region52: #{tpu_custom_call.1} parent=1 // pred_region
      %508 = dma.done [#allocation4], 128
    $region53: #{tpu_custom_call.1} parent=1 // pred_fallthru
      _
    %509 = vsyncpa [#allocation3], 1
    %510 = vsyncpa [#allocation6], 1
    %511 = vsyncpa [#allocation9], 1
    %512 = vsyncpa [#allocation4], 1

</llo_original>
